<compile_context>
chip_gen: v6e
topology: v6e:2x2x1
jax: 0.10.0
libtpu: 0.0.40
codegen_flags: <defaults>
</compile_context>

<pallas_src>
import functools

import jax
import jax.numpy as jnp
from jax import lax
from jax.experimental import pallas as pl
from jax.experimental.pallas import tpu as pltpu


# ----------------------------- Pallas kernel --------------------------------

def _spatial_transform_kernel(x_ref, w1_ref, w2_ref, mask_ref, o_ref,
                              s1_ref, s2_ref, *, K, PAD, BCL):
    """One batch chunk, lane-dense over the folded (batch*length) axis.

    x_ref    : (C_in, BCL)            folded input chunk
    w1_ref   : (CH, K*C_in + 1)       conv1 weights, tap-major, bias as last column
    w2_ref   : (2,  K*CH  + 1)        conv2 weights, tap-major, bias as last column
    mask_ref : (K, BCL)               per-tap segment-validity masks (0/1)
    o_ref    : (C_in, BCL)            folded output chunk
    s1_ref   : VMEM (K*C_in + 1, BCL + 2*PAD)   conv1 im2col staging
    s2_ref   : VMEM (K*CH  + 1, BCL + 2*PAD)    conv2 im2col staging
    """
    x = x_ref[...]
    masks = mask_ref[...]

    def fused_conv(v, w_aug_ref, s_ref):
        # Stage the im2col operand in scratch:
        #   row block t holds v shifted by (t - PAD) taps (cross-segment reads zeroed
        #   by the precomputed masks), the last row is all ones so the bias rides in
        #   the matmul.  Only the 2*PAD halo columns are zeroed — they realize the conv
        #   zero padding at the chunk edges; everything else is fully overwritten.
        R = v.shape[0]
        if PAD > 0:
            strip = jnp.zeros((s_ref.shape[0], 2 * PAD), jnp.float32)
            s_ref[:, 0:2 * PAD] = strip
            s_ref[:, BCL:BCL + 2 * PAD] = strip
        for t in range(K):                       # K is a small static Python int
            off = 2 * PAD - t                    # so a read at [PAD, PAD+BCL) sees
            vt = v if t == PAD else v * masks[t:t + 1, :]      # v[:, l + (t - PAD)]
            s_ref[t * R:(t + 1) * R, off:off + BCL] = vt
        s_ref[K * R:K * R + 1, PAD:PAD + BCL] = jnp.ones((1, BCL), jnp.float32)
        col = s_ref[:, PAD:PAD + BCL]            # (K*R + 1, BCL)
        # One MXU pass per conv, K*R+1-deep contraction, bias included.
        return jnp.dot(w_aug_ref[...], col, preferred_element_type=jnp.float32)

    h = jnp.maximum(fused_conv(x, w1_ref, s1_ref), 0.0)    # (CH, BCL)
    tf = jax.nn.sigmoid(fused_conv(h, w2_ref, s2_ref))     # (2, BCL)

    jitter = tf[0:1, :] - 0.5
    scale = tf[1:2, :] + 0.5
    o_ref[...] = (x * scale + jitter).astype(o_ref.dtype)


# ----------------------------- wrapper ---------------------------------------

def _pick_batch_chunk(B, L):
    """Batch elements folded into the lane axis per grid step.

    Targets a chunk lane width BC*L >= 128 (unmasked, lane-dense vector stores) while
    keeping blocks legal: either a single block covering everything, or a chunk lane
    width that is a multiple of 128.  For realistic batch sizes this gives a grid of
    >= 2 "parallel" steps (both v7x TensorCores busy); at toy sizes one step is optimal
    because the ~0.35us per-step pipeline overhead would dominate.
    """
    if B * L <= 256:
        return B
    bc = max(1, -(-128 // L))              # ceil(128 / L)
    while (bc * L) % 128 != 0 and bc < B:
        bc += 1
    return min(bc, B)


def spatial_transform(x, w1, b1, w2, b2, *, kernel_size, padding):
    """x: (B, C_in, L) float32. Returns (B, C_in, L) — input jittered and scaled."""
    B, C_in, L = x.shape
    CH = w1.shape[0]
    K, PAD = kernel_size, padding
    assert K == 2 * PAD + 1, "SpatialTransform needs 'same' convs (kernel == 2*padding + 1)"

    BC = _pick_batch_chunk(B, L)
    NB = -(-B // BC)
    Bp = NB * BC
    BCL = BC * L

    xf = x.astype(jnp.float32)
    if Bp != B:                            # pad batch up to a whole number of chunks
        xf = jnp.concatenate([xf, jnp.zeros((Bp - B, C_in, L), jnp.float32)], axis=0)
    # Lane-dense fold: (B, C_in, L) -> (C_in, B*L).  Pure layout plumbing (one relayout;
    # no padded copy of the data — conv zero padding happens inside the kernel).
    x_fold = jnp.transpose(xf, (1, 0, 2)).reshape(C_in, Bp * L)

    # Tap-major flattened weights with the bias folded in as an extra im2col column.
    w1_aug = jnp.concatenate(
        [jnp.transpose(w1, (0, 2, 1)).reshape(CH, K * C_in),
         b1.reshape(CH, 1)], axis=1).astype(jnp.float32)        # (CH, K*C_in + 1)
    w2_aug = jnp.concatenate(
        [jnp.transpose(w2, (0, 2, 1)).reshape(2, K * CH),
         b2.reshape(2, 1)], axis=1).astype(jnp.float32)         # (2, K*CH + 1)

    # Per-tap validity masks over the folded lane axis: tap t stores v[:, m] which is
    # read back at l = m - (t - PAD); it is valid only if that read stays inside the
    # same length-L segment (i.e. the same batch element).
    m = jnp.arange(BCL) % L
    masks = jnp.stack(
        [((m - (t - PAD) >= 0) & (m - (t - PAD) < L)) for t in range(K)]
    ).astype(jnp.float32)                                       # (K, BCL)

    kernel = functools.partial(_spatial_transform_kernel, K=K, PAD=PAD, BCL=BCL)

    out_fold = pl.pallas_call(
        kernel,
        out_shape=jax.ShapeDtypeStruct((C_in, Bp * L), jnp.float32),
        grid_spec=pltpu.PrefetchScalarGridSpec(
            num_scalar_prefetch=0,
            grid=(NB,),
            in_specs=[
                pl.BlockSpec((C_in, BCL), lambda i: (0, i)),
                pl.BlockSpec((CH, K * C_in + 1), lambda i: (0, 0)),
                pl.BlockSpec((2, K * CH + 1), lambda i: (0, 0)),
                pl.BlockSpec((K, BCL), lambda i: (0, 0)),
            ],
            out_specs=pl.BlockSpec((C_in, BCL), lambda i: (0, i)),
            # Scratch is tiny (<= ~100 KB at BCL~256); if L is scaled up, re-derive BCL
            # for v7x's 64 MiB VMEM rather than porting v5e/v6e tile sizes.
            scratch_shapes=[
                pltpu.VMEM((K * C_in + 1, BCL + 2 * PAD), jnp.float32),
                pltpu.VMEM((K * CH + 1, BCL + 2 * PAD), jnp.float32),
            ],
        ),
        compiler_params=pltpu.CompilerParams(
            dimension_semantics=("parallel",)),
    )(x_fold, w1_aug, w2_aug, masks)

    out = out_fold.reshape(C_in, Bp, L).transpose(1, 0, 2)[:B]
    return out.astype(x.dtype)


# ----------------------------- reference (plain JAX) ------------------------

def _reference(x, w1, b1, w2, b2, padding):
    def conv1d(inp, w, b):
        y = lax.conv_general_dilated(
            inp, w, window_strides=(1,), padding=[(padding, padding)],
            dimension_numbers=("NCH", "OIH", "NCH"))
        return y + b.reshape(1, -1, 1)

    h = jnp.maximum(conv1d(x, w1, b1), 0.0)
    tf = jax.nn.sigmoid(conv1d(h, w2, b2))
    jitter = tf[:, 0, :] - 0.5
    scale = tf[:, 1, :] + 0.5
    return x * scale[:, None, :] + jitter[:, None, :]


# ----------------------------- main ------------------------------------------

if __name__ == "__main__":
    # configs: input_channels=4, channel=32, kernel=3, padding=1
    C_IN, CH, K, PAD = 4, 32, 3, 1

    key = jax.random.PRNGKey(0)
    kx, kw1, kb1, kw2, kb2 = jax.random.split(key, 5)
    w1 = jax.random.normal(kw1, (CH, C_IN, K), dtype=jnp.float32) * 0.2
    b1 = jax.random.normal(kb1, (CH,), dtype=jnp.float32) * 0.1
    w2 = jax.random.normal(kw2, (2, CH, K), dtype=jnp.float32) * 0.2
    b2 = jax.random.normal(kb2, (2,), dtype=jnp.float32) * 0.1

    # Primary small case (single lane-dense chunk, one grid step).
    B, L = 2, 16
    x = jax.random.normal(kx, (B, C_IN, L), dtype=jnp.float32)
    out = jax.block_until_ready(
        spatial_transform(x, w1, b1, w2, b2, kernel_size=K, padding=PAD))
    ref = _reference(x, w1, b1, w2, b2, PAD)
    assert out.shape == (B, C_IN, L)
    assert jnp.allclose(out, ref, atol=1e-5, rtol=1e-5), \
        f"max abs err {jnp.max(jnp.abs(out - ref))}"

    # Larger case exercising the multi-chunk parallel grid and the batch-pad path.
    B2, L2 = 20, 16
    x2 = jax.random.normal(kx, (B2, C_IN, L2), dtype=jnp.float32)
    out2 = jax.block_until_ready(
        spatial_transform(x2, w1, b1, w2, b2, kernel_size=K, padding=PAD))
    ref2 = _reference(x2, w1, b1, w2, b2, PAD)
    assert jnp.allclose(out2, ref2, atol=1e-5, rtol=1e-5), \
        f"max abs err {jnp.max(jnp.abs(out2 - ref2))}"

    print("KERNEL_OK")
</pallas_src>

<mosaic_0001>
module attributes {stable_mosaic.version = 11 : i64} {
  func.func @_spatial_transform_kernel(%arg0: i32, %arg1: memref<4x32xf32, #tpu.memory_space<vmem>>, %arg2: memref<32x13xf32, #tpu.memory_space<vmem>>, %arg3: memref<2x97xf32, #tpu.memory_space<vmem>>, %arg4: memref<3x32xf32, #tpu.memory_space<vmem>>, %arg5: memref<4x32xf32, #tpu.memory_space<vmem>>, %arg6: memref<13x34xf32, #tpu.memory_space<vmem>>, %arg7: memref<97x34xf32, #tpu.memory_space<vmem>>) attributes {dimension_semantics = [#tpu.dimension_semantics<parallel>], iteration_bounds = array<i64: 1>, scalar_prefetch = 0 : i64, scratch_operands = 2 : i64, tpu.core_type = #tpu.core_type<tc>, window_params = [{transform_indices = @transform_0, window_bounds = array<i64: 4, 32>}, {pipeline_mode = #tpu.pipeline_mode<synchronous>, transform_indices = @transform_1, window_bounds = array<i64: 32, 13>}, {pipeline_mode = #tpu.pipeline_mode<synchronous>, transform_indices = @transform_2, window_bounds = array<i64: 2, 97>}, {pipeline_mode = #tpu.pipeline_mode<synchronous>, transform_indices = @transform_3, window_bounds = array<i64: 3, 32>}, {transform_indices = @transform_4, window_bounds = array<i64: 4, 32>}]} {
    %c0 = arith.constant 0 : index
    %c0_0 = arith.constant 0 : index
    %0 = vector.load %arg1[%c0, %c0_0] : memref<4x32xf32, #tpu.memory_space<vmem>>, vector<4x32xf32>
    %c0_1 = arith.constant 0 : index
    %c0_2 = arith.constant 0 : index
    %1 = vector.load %arg4[%c0_1, %c0_2] : memref<3x32xf32, #tpu.memory_space<vmem>>, vector<3x32xf32>
    %cst = arith.constant 0.000000e+00 : f32
    %2 = vector.broadcast %cst : f32 to vector<13x2xf32>
    %c0_3 = arith.constant 0 : index
    %c0_4 = arith.constant 0 : index
    %3 = vector.load %arg6[%c0_3, %c0_4] : memref<13x34xf32, #tpu.memory_space<vmem>>, vector<13x2xf32>
    tpu.vector_store %arg6[%c0_3, %c0_4], %2 {strides = array<i32>} : memref<13x34xf32, #tpu.memory_space<vmem>>, vector<13x2xf32>,
    %c0_5 = arith.constant 0 : index
    %c32 = arith.constant 32 : index
    %4 = vector.load %arg6[%c0_5, %c32] : memref<13x34xf32, #tpu.memory_space<vmem>>, vector<13x2xf32>
    tpu.vector_store %arg6[%c0_5, %c32], %2 {strides = array<i32>} : memref<13x34xf32, #tpu.memory_space<vmem>>, vector<13x2xf32>,
    %5 = vector.extract_strided_slice %1 {offsets = [0, 0], sizes = [1, 32], strides = [1, 1]} : vector<3x32xf32> to vector<1x32xf32>
    %6 = vector.broadcast %5 : vector<1x32xf32> to vector<4x32xf32>
    %7 = arith.mulf %0, %6 : vector<4x32xf32>
    %c0_6 = arith.constant 0 : index
    %c2 = arith.constant 2 : index
    %8 = vector.load %arg6[%c0_6, %c2] : memref<13x34xf32, #tpu.memory_space<vmem>>, vector<4x32xf32>
    tpu.vector_store %arg6[%c0_6, %c2], %7 {strides = array<i32>} : memref<13x34xf32, #tpu.memory_space<vmem>>, vector<4x32xf32>,
    %c4 = arith.constant 4 : index
    %c1 = arith.constant 1 : index
    %9 = vector.load %arg6[%c4, %c1] : memref<13x34xf32, #tpu.memory_space<vmem>>, vector<4x32xf32>
    tpu.vector_store %arg6[%c4, %c1], %0 {strides = array<i32>} : memref<13x34xf32, #tpu.memory_space<vmem>>, vector<4x32xf32>,
    %10 = vector.extract_strided_slice %1 {offsets = [2, 0], sizes = [1, 32], strides = [1, 1]} : vector<3x32xf32> to vector<1x32xf32>
    %11 = vector.broadcast %10 : vector<1x32xf32> to vector<4x32xf32>
    %12 = arith.mulf %0, %11 : vector<4x32xf32>
    %c8 = arith.constant 8 : index
    %c0_7 = arith.constant 0 : index
    %13 = vector.load %arg6[%c8, %c0_7] : memref<13x34xf32, #tpu.memory_space<vmem>>, vector<4x32xf32>
    tpu.vector_store %arg6[%c8, %c0_7], %12 {strides = array<i32>} : memref<13x34xf32, #tpu.memory_space<vmem>>, vector<4x32xf32>,
    %cst_8 = arith.constant 1.000000e+00 : f32
    %14 = vector.broadcast %cst_8 : f32 to vector<1x32xf32>
    %c12 = arith.constant 12 : index
    %c1_9 = arith.constant 1 : index
    %15 = vector.load %arg6[%c12, %c1_9] : memref<13x34xf32, #tpu.memory_space<vmem>>, vector<1x32xf32>
    tpu.vector_store %arg6[%c12, %c1_9], %14 {strides = array<i32>} : memref<13x34xf32, #tpu.memory_space<vmem>>, vector<1x32xf32>,
    %c0_10 = arith.constant 0 : index
    %c1_11 = arith.constant 1 : index
    %16 = vector.load %arg6[%c0_10, %c1_11] : memref<13x34xf32, #tpu.memory_space<vmem>>, vector<13x32xf32>
    %c0_12 = arith.constant 0 : index
    %c0_13 = arith.constant 0 : index
    %17 = vector.load %arg2[%c0_12, %c0_13] : memref<32x13xf32, #tpu.memory_space<vmem>>, vector<32x13xf32>
    %cst_14 = arith.constant dense<0.000000e+00> : vector<32x32xf32>
    %18 = tpu.matmul %17, %16, %cst_14 {dimension_numbers = #tpu.dot_dimension_numbers<[1], [0], [0], [1], [0, 0, 1, 1], [], []>} : vector<32x13xf32>, vector<13x32xf32>, vector<32x32xf32> -> vector<32x32xf32>
    %cst_15 = arith.constant 0.000000e+00 : f32
    %19 = vector.broadcast %cst_15 : f32 to vector<32x32xf32>
    %20 = arith.maximumf %18, %19 : vector<32x32xf32>
    %cst_16 = arith.constant 0.000000e+00 : f32
    %21 = vector.broadcast %cst_16 : f32 to vector<97x2xf32>
    %c0_17 = arith.constant 0 : index
    %c0_18 = arith.constant 0 : index
    %22 = vector.load %arg7[%c0_17, %c0_18] : memref<97x34xf32, #tpu.memory_space<vmem>>, vector<97x2xf32>
    tpu.vector_store %arg7[%c0_17, %c0_18], %21 {strides = array<i32>} : memref<97x34xf32, #tpu.memory_space<vmem>>, vector<97x2xf32>,
    %c0_19 = arith.constant 0 : index
    %c32_20 = arith.constant 32 : index
    %23 = vector.load %arg7[%c0_19, %c32_20] : memref<97x34xf32, #tpu.memory_space<vmem>>, vector<97x2xf32>
    tpu.vector_store %arg7[%c0_19, %c32_20], %21 {strides = array<i32>} : memref<97x34xf32, #tpu.memory_space<vmem>>, vector<97x2xf32>,
    %24 = vector.extract_strided_slice %1 {offsets = [0, 0], sizes = [1, 32], strides = [1, 1]} : vector<3x32xf32> to vector<1x32xf32>
    %25 = vector.broadcast %24 : vector<1x32xf32> to vector<32x32xf32>
    %26 = arith.mulf %20, %25 : vector<32x32xf32>
    %c0_21 = arith.constant 0 : index
    %c2_22 = arith.constant 2 : index
    %27 = vector.load %arg7[%c0_21, %c2_22] : memref<97x34xf32, #tpu.memory_space<vmem>>, vector<32x32xf32>
    tpu.vector_store %arg7[%c0_21, %c2_22], %26 {strides = array<i32>} : memref<97x34xf32, #tpu.memory_space<vmem>>, vector<32x32xf32>,
    %c32_23 = arith.constant 32 : index
    %c1_24 = arith.constant 1 : index
    %28 = vector.load %arg7[%c32_23, %c1_24] : memref<97x34xf32, #tpu.memory_space<vmem>>, vector<32x32xf32>
    tpu.vector_store %arg7[%c32_23, %c1_24], %20 {strides = array<i32>} : memref<97x34xf32, #tpu.memory_space<vmem>>, vector<32x32xf32>,
    %29 = vector.extract_strided_slice %1 {offsets = [2, 0], sizes = [1, 32], strides = [1, 1]} : vector<3x32xf32> to vector<1x32xf32>
    %30 = vector.broadcast %29 : vector<1x32xf32> to vector<32x32xf32>
    %31 = arith.mulf %20, %30 : vector<32x32xf32>
    %c64 = arith.constant 64 : index
    %c0_25 = arith.constant 0 : index
    %32 = vector.load %arg7[%c64, %c0_25] : memref<97x34xf32, #tpu.memory_space<vmem>>, vector<32x32xf32>
    tpu.vector_store %arg7[%c64, %c0_25], %31 {strides = array<i32>} : memref<97x34xf32, #tpu.memory_space<vmem>>, vector<32x32xf32>,
    %cst_26 = arith.constant 1.000000e+00 : f32
    %33 = vector.broadcast %cst_26 : f32 to vector<1x32xf32>
    %c96 = arith.constant 96 : index
    %c1_27 = arith.constant 1 : index
    %34 = vector.load %arg7[%c96, %c1_27] : memref<97x34xf32, #tpu.memory_space<vmem>>, vector<1x32xf32>
    tpu.vector_store %arg7[%c96, %c1_27], %33 {strides = array<i32>} : memref<97x34xf32, #tpu.memory_space<vmem>>, vector<1x32xf32>,
    %c0_28 = arith.constant 0 : index
    %c1_29 = arith.constant 1 : index
    %35 = vector.load %arg7[%c0_28, %c1_29] : memref<97x34xf32, #tpu.memory_space<vmem>>, vector<97x32xf32>
    %c0_30 = arith.constant 0 : index
    %c0_31 = arith.constant 0 : index
    %36 = vector.load %arg3[%c0_30, %c0_31] : memref<2x97xf32, #tpu.memory_space<vmem>>, vector<2x97xf32>
    %cst_32 = arith.constant dense<0.000000e+00> : vector<2x32xf32>
    %37 = tpu.matmul %36, %35, %cst_32 {dimension_numbers = #tpu.dot_dimension_numbers<[1], [0], [0], [1], [0, 0, 1, 1], [], []>} : vector<2x97xf32>, vector<97x32xf32>, vector<2x32xf32> -> vector<2x32xf32>
    %38 = arith.negf %37 : vector<2x32xf32>
    %39 = math.exp %38 : vector<2x32xf32>
    %cst_33 = arith.constant 1.000000e+00 : f32
    %40 = vector.broadcast %cst_33 : f32 to vector<2x32xf32>
    %41 = arith.addf %40, %39 : vector<2x32xf32>
    %42 = arith.divf %40, %41 : vector<2x32xf32>
    %43 = vector.extract_strided_slice %42 {offsets = [0, 0], sizes = [1, 32], strides = [1, 1]} : vector<2x32xf32> to vector<1x32xf32>
    %cst_34 = arith.constant 5.000000e-01 : f32
    %44 = vector.broadcast %cst_34 : f32 to vector<1x32xf32>
    %45 = arith.subf %43, %44 : vector<1x32xf32>
    %46 = vector.extract_strided_slice %42 {offsets = [1, 0], sizes = [1, 32], strides = [1, 1]} : vector<2x32xf32> to vector<1x32xf32>
    %cst_35 = arith.constant 5.000000e-01 : f32
    %47 = vector.broadcast %cst_35 : f32 to vector<1x32xf32>
    %48 = arith.addf %46, %47 : vector<1x32xf32>
    %49 = vector.broadcast %48 : vector<1x32xf32> to vector<4x32xf32>
    %50 = arith.mulf %0, %49 : vector<4x32xf32>
    %51 = vector.broadcast %45 : vector<1x32xf32> to vector<4x32xf32>
    %52 = arith.addf %50, %51 : vector<4x32xf32>
    %c0_36 = arith.constant 0 : index
    %c0_37 = arith.constant 0 : index
    %53 = vector.load %arg5[%c0_36, %c0_37] : memref<4x32xf32, #tpu.memory_space<vmem>>, vector<4x32xf32>
    tpu.vector_store %arg5[%c0_36, %c0_37], %52 {strides = array<i32>} : memref<4x32xf32, #tpu.memory_space<vmem>>, vector<4x32xf32>,
    return
  }
  func.func @transform_0(%arg0: i32) -> (i32, i32) {
    %c0_i32 = arith.constant 0 : i32
    %c0_i32_0 = arith.constant 0 : i32
    return %c0_i32, %arg0 : i32, i32
  }
  func.func @transform_1(%arg0: i32) -> (i32, i32) {
    %c0_i32 = arith.constant 0 : i32
    %c0_i32_0 = arith.constant 0 : i32
    %c0_i32_1 = arith.constant 0 : i32
    return %c0_i32, %c0_i32_0 : i32, i32
  }
  func.func @transform_2(%arg0: i32) -> (i32, i32) {
    %c0_i32 = arith.constant 0 : i32
    %c0_i32_0 = arith.constant 0 : i32
    %c0_i32_1 = arith.constant 0 : i32
    return %c0_i32, %c0_i32_0 : i32, i32
  }
  func.func @transform_3(%arg0: i32) -> (i32, i32) {
    %c0_i32 = arith.constant 0 : i32
    %c0_i32_0 = arith.constant 0 : i32
    %c0_i32_1 = arith.constant 0 : i32
    return %c0_i32, %c0_i32_0 : i32, i32
  }
  func.func @transform_4(%arg0: i32) -> (i32, i32) {
    %c0_i32 = arith.constant 0 : i32
    %c0_i32_0 = arith.constant 0 : i32
    return %c0_i32, %arg0 : i32, i32
  }
}

</mosaic_0001>

<llo_original>
// kernel: tpu_custom_call.1
$region0: #{tpu_custom_call.1}
  #allocation0 [shape = 'u32[]', space=smem, size = 0x4, offset = 0x4, fixed_abs, tag = 'smem constant byte address 0x4 - core index']
  #allocation1 [shape = 'u32[144,128]{1,0:T(1,128)}', space=vmem, size = 0x12000, scoped, tag = 'internal scratch']
  #allocation2 [shape = 'f32[13,34]{1,0:T(8,128)}', space=vmem, size = 0x2000, scoped, tag = 'scratch operand']
  #allocation3 [shape = 'f32[97,34]{1,0:T(8,128)}', space=vmem, size = 0xd000, scoped, tag = 'scratch operand']
  %s0 = inlined_call_operand.vmem [shape: f32[4,32], index: 0, kind: input, shape index: {}]
  %s1 = inlined_call_operand.vmem [shape: f32[32,13], index: 1, kind: input, shape index: {}]
  %s2 = inlined_call_operand.vmem [shape: f32[2,97], index: 2, kind: input, shape index: {}]
  %s3 = inlined_call_operand.vmem [shape: f32[3,32], index: 3, kind: input, shape index: {}]
  %s4 = inlined_call_operand.hbm [shape: f32[4,32], index: 4, kind: output, shape index: {}]
  %s5 = sld [smem:[#allocation0]]
  $region26: #{tpu_custom_call.1} parent=0
    _
  %s7 = ssub.s32 1, %s5
  %s8 = scalar_select 0, %s7, %s5
  $region1: #{tpu_custom_call.1} parent=0
    #allocation4 [shape = 'u8[2048]{0}', space=vmem, size = 0x800, scoped, tag = 'output window, operand 0, single buffered']
    #allocation5 [shape = 's32[1]{0}', space=sflag, size = 0x4, scoped, tag = 'scoped memory for tpu_custom_call.1']
    %9 = vsyncpa [#allocation5], 0
    // Predicated region
    $region2: #{tpu_custom_call.1} parent=1 // pred_check
      _
    $region3: #{tpu_custom_call.1} parent=1 // pred_check_branch
      %11 = sbr.rel (0) target = $region5
    $region4: #{tpu_custom_call.1} parent=1 // pred_region
      _
    $region5: #{tpu_custom_call.1} parent=1 // pred_fallthru
      _
    // Predicated region
    $region6: #{tpu_custom_call.1} parent=1 // pred_check
      _
    $region7: #{tpu_custom_call.1} parent=1 // pred_check_branch
      %13 = sbr.rel (0) target = $region9
    $region8: #{tpu_custom_call.1} parent=1 // pred_region
      _
    $region9: #{tpu_custom_call.1} parent=1 // pred_fallthru
      _
    // Predicated region
    $region10: #{tpu_custom_call.1} parent=1 // pred_check
      _
    $region11: #{tpu_custom_call.1} parent=1 // pred_check_branch
      %15 = sbr.rel (0) target = $region13
    $region12: #{tpu_custom_call.1} parent=1 // pred_region
      _
    $region13: #{tpu_custom_call.1} parent=1 // pred_fallthru
      _
    // Predicated region
    $region14: #{tpu_custom_call.1} parent=1 // pred_check
      _
    $region15: #{tpu_custom_call.1} parent=1 // pred_check_branch
      %17 = sbr.rel (0) target = $region17
    $region16: #{tpu_custom_call.1} parent=1 // pred_region
      _
    $region17: #{tpu_custom_call.1} parent=1 // pred_fallthru
      _
    %v18 = vld [vmem:[%s0] sm:$0xf]
    %v19 = vld [vmem:[%s3] sm:$0x7]
    %vm20 = vcmask 15360
    %21 = vst.msk [vmem:[#allocation2] sm:$0xff] %vm20, 0.0
    %vm22 = vcmask 12288
    %23 = vst.msk [vmem:[#allocation2 + $0x8] sm:$0x1f] %vm22, 0.0
    %vm24 = vcmask 277760
    %25 = vst.msk [vmem:[#allocation2] sm:$0xff] %vm24, 0.0
    %vm26 = vcmask 274688
    %27 = vst.msk [vmem:[#allocation2 + $0x8] sm:$0x1f] %vm26, 0.0
    %v28 = vlaneseq
    %v29 = vshrl.u32 %v28, 7
    %v30 = vsub.s32 0, %v29
    %v31 = vrot.slane %v19, %v30
    %v32 = vmul.f32 %v18, %v31
    %34 = vrot.lane.b32.xlu0 %v32, 2
    %v35 = vpop.permute.xlu0 %34
    %vm37 = vcmask 273424
    %38 = vst.msk [vmem:[#allocation2] sm:$0xf] %vm37, %v35
    %40 = vrot.lane.b32.xlu0 %v18, 1
    %v41 = vpop.permute.xlu0 %40
    %vm43 = vcmask 265224
    %44 = vst.msk [vmem:[#allocation2 + $0x4] sm:$0xf] %vm43, %v41
    %v45 = vlaneseq
    %v46 = vshrl.u32 %v45, 7
    %v47 = vsub.s32 2, %v46
    %v48 = vrot.slane %v19, %v47
    %v49 = vmul.f32 %v18, %v48
    %vm50 = vcmask 257024
    %51 = vst.msk [vmem:[#allocation2 + $0x8] sm:$0xf] %vm50, %v49
    %vm52 = vcmask 262152
    %53 = vst.msk [vmem:[#allocation2 + $0xc] sm:$0x1] %vm52, 1.0
    %v54 = vld [vmem:[#allocation2] sm:$0xff]
    %v55 = vld [vmem:[#allocation2 + $0x8] sm:$0x1f]
    %v56 = vld [vmem:[%s1] sm:$0xff]
    %v57 = vld [vmem:[%s1 + $0x8] sm:$0xff]
    %v58 = vld [vmem:[%s1 + $0x10] sm:$0xff]
    %v59 = vld [vmem:[%s1 + $0x18] sm:$0xff]
    %62 = vrot.lane.b32.xlu0 %v54, 127
    %v63 = vpop.permute.xlu0 %62
    %64 = vrot.lane.b32.xlu0 %v55, 127
    %v65 = vpop.permute.xlu0 %64
    %vm67 = vcmask 105472
    %v69 = vsel %vm67, %v56, 0
    %v72 = vsel %vm67, %v57, 0
    %v75 = vsel %vm67, %v58, 0
    %v78 = vsel %vm67, %v59, 0
    %vm80 = vcmask 1044480
    %v81 = vsel %vm80, %v65, 0
    %83 = vmatprep.subr.mxu0 0.0
    %84 = vmatpush1.msra.mxu0 0.0
    %85 = vmatprep.subr.mxu0 0.0
    %86 = vmatpush1.msra.mxu0 0.0
    %87 = vmatprep.subr.mxu0 0.0
    %88 = vmatpush1.msra.mxu0 0.0
    %89 = vmatprep.subr.mxu0 0.0
    %90 = vmatpush1.msra.mxu0 0.0
    %91 = vmatprep.subr.mxu0 0.0
    %92 = vmatpush1.msra.mxu0 0.0
    %93 = vmatprep.subr.mxu0 0.0
    %94 = vmatpush1.msra.mxu0 0.0
    %95 = vmatprep.subr.mxu0 0.0
    %96 = vmatpush1.msra.mxu0 0.0
    %97 = vmatprep.subr.mxu0 0.0
    %98 = vmatpush1.msra.mxu0 0.0
    %99 = vmatprep.subr.mxu0 0.0
    %100 = vmatpush1.msra.mxu0 0.0
    %101 = vmatprep.subr.mxu0 0.0
    %102 = vmatpush1.msra.mxu0 0.0
    %103 = vmatprep.subr.mxu0 0.0
    %104 = vmatpush1.msra.mxu0 0.0
    %105 = vmatprep.subr.mxu0 0.0
    %106 = vmatpush1.msra.mxu0 0.0
    %107 = vmatprep.subr.mxu0 0.0
    %108 = vmatpush1.msra.mxu0 0.0
    %109 = vmatprep.subr.mxu0 0.0
    %110 = vmatpush1.msra.mxu0 0.0
    %111 = vmatprep.subr.mxu0 0.0
    %112 = vmatpush1.msra.mxu0 %v81
    %113 = vmatprep.subr.mxu0 0.0
    %114 = vmatpush1.msra.mxu0 %v63
    %115 = vmatprep.subr.mxu0 0.0
    %116 = vmatpush2.msra.mxu0 0.0
    %117 = vmatprep.subr.mxu0 0.0
    %118 = vmatpush2.msra.mxu0 0.0
    %119 = vmatprep.subr.mxu0 0.0
    %120 = vmatpush2.msra.mxu0 0.0
    %121 = vmatprep.subr.mxu0 0.0
    %122 = vmatpush2.msra.mxu0 0.0
    %123 = vmatprep.subr.mxu0 0.0
    %124 = vmatpush2.msra.mxu0 0.0
    %125 = vmatprep.subr.mxu0 0.0
    %126 = vmatpush2.msra.mxu0 0.0
    %127 = vmatprep.subr.mxu0 0.0
    %128 = vmatpush2.msra.mxu0 0.0
    %129 = vmatprep.subr.mxu0 0.0
    %130 = vmatpush2.msra.mxu0 0.0
    %131 = vmatprep.subr.mxu0 0.0
    %132 = vmatpush2.msra.mxu0 0.0
    %133 = vmatprep.subr.mxu0 0.0
    %134 = vmatpush2.msra.mxu0 0.0
    %135 = vmatprep.subr.mxu0 0.0
    %136 = vmatpush2.msra.mxu0 0.0
    %137 = vmatprep.subr.mxu0 0.0
    %138 = vmatpush2.msra.mxu0 0.0
    %139 = vmatprep.subr.mxu0 0.0
    %140 = vmatpush2.msra.mxu0 0.0
    %141 = vmatprep.subr.mxu0 0.0
    %142 = vmatpush2.msra.mxu0 0.0
    %143 = vmatprep.subr.mxu0 0.0
    %144 = vmatpush2.msra.mxu0 0.0
    %145 = vmatprep.subr.mxu0 0.0
    %146 = vmatpush2.msra.mxu0 0.0
    %147 = vmatprep.mubr.f32.mxu0 0.0
    %148 = vmatmul.mubr.f32.gmra.mxu0 %v69
    %v149 = vpop.f32.mrf.mxu0
    %v150 = vadd.f32 0.0, %v149
    %v151 = vpop.f32.mrf.mxu0
    %152 = vmatprep.mubr.f32.mxu0 0.0
    %153 = vmatmul.mubr.f32.gmra.mxu0 %v72
    %v154 = vpop.f32.mrf.mxu0
    %v155 = vadd.f32 0.0, %v154
    %v156 = vpop.f32.mrf.mxu0
    %157 = vmatprep.mubr.f32.mxu0 0.0
    %158 = vmatmul.mubr.f32.gmra.mxu0 %v75
    %v159 = vpop.f32.mrf.mxu0
    %v160 = vadd.f32 0.0, %v159
    %v161 = vpop.f32.mrf.mxu0
    %162 = vmatprep.mubr.f32.mxu0 0.0
    %163 = vmatmul.mubr.f32.gmra.mxu0 %v78
    %v164 = vpop.f32.mrf.mxu0
    %v165 = vadd.f32 0.0, %v164
    %v166 = vpop.f32.mrf.mxu0
    %167 = vdwg.mxu0
    %v168 = vmax.f32 %v150, 0.0
    %v169 = vmax.f32 %v155, 0.0
    %v170 = vmax.f32 %v160, 0.0
    %v171 = vmax.f32 %v165, 0.0
    %172 = vst.msk [vmem:[#allocation3] sm:$0xff] %vm20, 0.0
    %173 = vst.msk [vmem:[#allocation3 + $0x8] sm:$0xff] %vm20, 0.0
    %174 = vst.msk [vmem:[#allocation3 + $0x10] sm:$0xff] %vm20, 0.0
    %175 = vst.msk [vmem:[#allocation3 + $0x18] sm:$0xff] %vm20, 0.0
    %176 = vst.msk [vmem:[#allocation3 + $0x20] sm:$0xff] %vm20, 0.0
    %177 = vst.msk [vmem:[#allocation3 + $0x28] sm:$0xff] %vm20, 0.0
    %178 = vst.msk [vmem:[#allocation3 + $0x30] sm:$0xff] %vm20, 0.0
    %179 = vst.msk [vmem:[#allocation3 + $0x38] sm:$0xff] %vm20, 0.0
    %180 = vst.msk [vmem:[#allocation3 + $0x40] sm:$0xff] %vm20, 0.0
    %181 = vst.msk [vmem:[#allocation3 + $0x48] sm:$0xff] %vm20, 0.0
    %182 = vst.msk [vmem:[#allocation3 + $0x50] sm:$0xff] %vm20, 0.0
    %183 = vst.msk [vmem:[#allocation3 + $0x58] sm:$0xff] %vm20, 0.0
    %vm184 = vcmask 8192
    %185 = vst.msk [vmem:[#allocation3 + $0x60] sm:$0x1] %vm184, 0.0
    %186 = vst.msk [vmem:[#allocation3] sm:$0xff] %vm24, 0.0
    %187 = vst.msk [vmem:[#allocation3 + $0x8] sm:$0xff] %vm24, 0.0
    %188 = vst.msk [vmem:[#allocation3 + $0x10] sm:$0xff] %vm24, 0.0
    %189 = vst.msk [vmem:[#allocation3 + $0x18] sm:$0xff] %vm24, 0.0
    %190 = vst.msk [vmem:[#allocation3 + $0x20] sm:$0xff] %vm24, 0.0
    %191 = vst.msk [vmem:[#allocation3 + $0x28] sm:$0xff] %vm24, 0.0
    %192 = vst.msk [vmem:[#allocation3 + $0x30] sm:$0xff] %vm24, 0.0
    %193 = vst.msk [vmem:[#allocation3 + $0x38] sm:$0xff] %vm24, 0.0
    %194 = vst.msk [vmem:[#allocation3 + $0x40] sm:$0xff] %vm24, 0.0
    %195 = vst.msk [vmem:[#allocation3 + $0x48] sm:$0xff] %vm24, 0.0
    %196 = vst.msk [vmem:[#allocation3 + $0x50] sm:$0xff] %vm24, 0.0
    %197 = vst.msk [vmem:[#allocation3 + $0x58] sm:$0xff] %vm24, 0.0
    %vm198 = vcmask 270592
    %199 = vst.msk [vmem:[#allocation3 + $0x60] sm:$0x1] %vm198, 0.0
    %v200 = vmul.f32 %v168, %v31
    %v201 = vmul.f32 %v169, %v31
    %v202 = vmul.f32 %v170, %v31
    %v203 = vmul.f32 %v171, %v31
    %208 = vrot.lane.b32.xlu0 %v200, 2
    %v209 = vpop.permute.xlu0 %208
    %210 = vrot.lane.b32.xlu0 %v201, 2
    %v211 = vpop.permute.xlu0 %210
    %212 = vrot.lane.b32.xlu0 %v202, 2
    %v213 = vpop.permute.xlu0 %212
    %214 = vrot.lane.b32.xlu0 %v203, 2
    %v215 = vpop.permute.xlu0 %214
    %vm220 = vcmask 277520
    %221 = vst.msk [vmem:[#allocation3] sm:$0xff] %vm220, %v209
    %222 = vst.msk [vmem:[#allocation3 + $0x8] sm:$0xff] %vm220, %v211
    %223 = vst.msk [vmem:[#allocation3 + $0x10] sm:$0xff] %vm220, %v213
    %224 = vst.msk [vmem:[#allocation3 + $0x18] sm:$0xff] %vm220, %v215
    %229 = vrot.lane.b32.xlu0 %v168, 1
    %v230 = vpop.permute.xlu0 %229
    %231 = vrot.lane.b32.xlu0 %v169, 1
    %v232 = vpop.permute.xlu0 %231
    %233 = vrot.lane.b32.xlu0 %v170, 1
    %v234 = vpop.permute.xlu0 %233
    %235 = vrot.lane.b32.xlu0 %v171, 1
    %v236 = vpop.permute.xlu0 %235
    %vm241 = vcmask 269320
    %242 = vst.msk [vmem:[#allocation3 + $0x20] sm:$0xff] %vm241, %v230
    %243 = vst.msk [vmem:[#allocation3 + $0x28] sm:$0xff] %vm241, %v232
    %244 = vst.msk [vmem:[#allocation3 + $0x30] sm:$0xff] %vm241, %v234
    %245 = vst.msk [vmem:[#allocation3 + $0x38] sm:$0xff] %vm241, %v236
    %v246 = vmul.f32 %v168, %v48
    %v247 = vmul.f32 %v169, %v48
    %v248 = vmul.f32 %v170, %v48
    %v249 = vmul.f32 %v171, %v48
    %vm250 = vcmask 261120
    %251 = vst.msk [vmem:[#allocation3 + $0x40] sm:$0xff] %vm250, %v246
    %252 = vst.msk [vmem:[#allocation3 + $0x48] sm:$0xff] %vm250, %v247
    %253 = vst.msk [vmem:[#allocation3 + $0x50] sm:$0xff] %vm250, %v248
    %254 = vst.msk [vmem:[#allocation3 + $0x58] sm:$0xff] %vm250, %v249
    %255 = vst.msk [vmem:[#allocation3 + $0x60] sm:$0x1] %vm52, 1.0
    %v256 = vld [vmem:[#allocation3] sm:$0xff]
    %v257 = vld [vmem:[#allocation3 + $0x8] sm:$0xff]
    %v258 = vld [vmem:[#allocation3 + $0x10] sm:$0xff]
    %v259 = vld [vmem:[#allocation3 + $0x18] sm:$0xff]
    %v260 = vld [vmem:[#allocation3 + $0x20] sm:$0xff]
    %v261 = vld [vmem:[#allocation3 + $0x28] sm:$0xff]
    %v262 = vld [vmem:[#allocation3 + $0x30] sm:$0xff]
    %v263 = vld [vmem:[#allocation3 + $0x38] sm:$0xff]
    %v264 = vld [vmem:[#allocation3 + $0x40] sm:$0xff]
    %v265 = vld [vmem:[#allocation3 + $0x48] sm:$0xff]
    %v266 = vld [vmem:[#allocation3 + $0x50] sm:$0xff]
    %v267 = vld [vmem:[#allocation3 + $0x58] sm:$0xff]
    %v268 = vld [vmem:[#allocation3 + $0x60] sm:$0x1]
    %v269 = vld [vmem:[%s2] sm:$0x3]
    %283 = vrot.lane.b32.xlu0 %v256, 127
    %v284 = vpop.permute.xlu0 %283
    %285 = vrot.lane.b32.xlu0 %v257, 127
    %v286 = vpop.permute.xlu0 %285
    %287 = vrot.lane.b32.xlu0 %v258, 127
    %v288 = vpop.permute.xlu0 %287
    %289 = vrot.lane.b32.xlu0 %v259, 127
    %v290 = vpop.permute.xlu0 %289
    %291 = vrot.lane.b32.xlu0 %v260, 127
    %v292 = vpop.permute.xlu0 %291
    %293 = vrot.lane.b32.xlu0 %v261, 127
    %v294 = vpop.permute.xlu0 %293
    %295 = vrot.lane.b32.xlu0 %v262, 127
    %v296 = vpop.permute.xlu0 %295
    %297 = vrot.lane.b32.xlu0 %v263, 127
    %v298 = vpop.permute.xlu0 %297
    %299 = vrot.lane.b32.xlu0 %v264, 127
    %v300 = vpop.permute.xlu0 %299
    %301 = vrot.lane.b32.xlu0 %v265, 127
    %v302 = vpop.permute.xlu0 %301
    %303 = vrot.lane.b32.xlu0 %v266, 127
    %v304 = vpop.permute.xlu0 %303
    %305 = vrot.lane.b32.xlu0 %v267, 127
    %v306 = vpop.permute.xlu0 %305
    %307 = vrot.lane.b32.xlu0 %v268, 127
    %v308 = vpop.permute.xlu0 %307
    %vm321 = vcmask 793600
    %v323 = vsel %vm321, %v269, 0
    %vm325 = vcmask 1040384
    %v326 = vsel %vm325, %v308, 0
    %328 = vmatprep.subr.mxu0 0.0
    %329 = vmatpush1.msra.mxu0 0.0
    %330 = vmatprep.subr.mxu0 0.0
    %331 = vmatpush1.msra.mxu0 0.0
    %332 = vmatprep.subr.mxu0 0.0
    %333 = vmatpush1.msra.mxu0 0.0
    %334 = vmatprep.subr.mxu0 0.0
    %335 = vmatpush1.msra.mxu0 %v326
    %336 = vmatprep.subr.mxu0 0.0
    %337 = vmatpush1.msra.mxu0 %v306
    %338 = vmatprep.subr.mxu0 0.0
    %339 = vmatpush1.msra.mxu0 %v304
    %340 = vmatprep.subr.mxu0 0.0
    %341 = vmatpush1.msra.mxu0 %v302
    %342 = vmatprep.subr.mxu0 0.0
    %343 = vmatpush1.msra.mxu0 %v300
    %344 = vmatprep.subr.mxu0 0.0
    %345 = vmatpush1.msra.mxu0 %v298
    %346 = vmatprep.subr.mxu0 0.0
    %347 = vmatpush1.msra.mxu0 %v296
    %348 = vmatprep.subr.mxu0 0.0
    %349 = vmatpush1.msra.mxu0 %v294
    %350 = vmatprep.subr.mxu0 0.0
    %351 = vmatpush1.msra.mxu0 %v292
    %352 = vmatprep.subr.mxu0 0.0
    %353 = vmatpush1.msra.mxu0 %v290
    %354 = vmatprep.subr.mxu0 0.0
    %355 = vmatpush1.msra.mxu0 %v288
    %356 = vmatprep.subr.mxu0 0.0
    %357 = vmatpush1.msra.mxu0 %v286
    %358 = vmatprep.subr.mxu0 0.0
    %359 = vmatpush1.msra.mxu0 %v284
    %360 = vmatprep.subr.mxu0 0.0
    %361 = vmatpush2.msra.mxu0 0.0
    %362 = vmatprep.subr.mxu0 0.0
    %363 = vmatpush2.msra.mxu0 0.0
    %364 = vmatprep.subr.mxu0 0.0
    %365 = vmatpush2.msra.mxu0 0.0
    %366 = vmatprep.subr.mxu0 0.0
    %367 = vmatpush2.msra.mxu0 0.0
    %368 = vmatprep.subr.mxu0 0.0
    %369 = vmatpush2.msra.mxu0 0.0
    %370 = vmatprep.subr.mxu0 0.0
    %371 = vmatpush2.msra.mxu0 0.0
    %372 = vmatprep.subr.mxu0 0.0
    %373 = vmatpush2.msra.mxu0 0.0
    %374 = vmatprep.subr.mxu0 0.0
    %375 = vmatpush2.msra.mxu0 0.0
    %376 = vmatprep.subr.mxu0 0.0
    %377 = vmatpush2.msra.mxu0 0.0
    %378 = vmatprep.subr.mxu0 0.0
    %379 = vmatpush2.msra.mxu0 0.0
    %380 = vmatprep.subr.mxu0 0.0
    %381 = vmatpush2.msra.mxu0 0.0
    %382 = vmatprep.subr.mxu0 0.0
    %383 = vmatpush2.msra.mxu0 0.0
    %384 = vmatprep.subr.mxu0 0.0
    %385 = vmatpush2.msra.mxu0 0.0
    %386 = vmatprep.subr.mxu0 0.0
    %387 = vmatpush2.msra.mxu0 0.0
    %388 = vmatprep.subr.mxu0 0.0
    %389 = vmatpush2.msra.mxu0 0.0
    %390 = vmatprep.subr.mxu0 0.0
    %391 = vmatpush2.msra.mxu0 0.0
    %392 = vmatprep.mubr.f32.mxu0 0.0
    %393 = vmatmul.mubr.f32.gmra.mxu0 %v323
    %v394 = vpop.f32.mrf.mxu0
    %v395 = vadd.f32 0.0, %v394
    %v396 = vpop.f32.mrf.mxu0
    %397 = vdwg.mxu0
    %v398 = vxor.u32 %v395, 2147483648
    %v399 = vmul.f32 %v398, 1.442695
    %v400 = vpow.pop %v399
    %v401 = vadd.f32 %v400, 1.0
    %v402 = vrcp.pop %v401
    %v403 = vmul.f32 1.0, %v402
    %v404 = vsub.f32 %v403, 0.5
    %v405 = vadd.f32 %v403, 0.5
    %v406 = vlaneseq
    %v407 = vshrl.u32 %v406, 7
    %v408 = vsub.s32 1, %v407
    %v409 = vrot.slane %v405, %v408
    %v410 = vmul.f32 %v18, %v409
    %v411 = vlaneseq
    %v412 = vshrl.u32 %v411, 7
    %v413 = vsub.s32 0, %v412
    %v414 = vrot.slane %v404, %v413
    %v415 = vadd.f32 %v410, %v414
    %416 = vst.msk [vmem:[#allocation4] sm:$0xf] %vm50, %v415
    // Predicated region
    $region18: #{tpu_custom_call.1} parent=1 // pred_check
      _
    $region19: #{tpu_custom_call.1} parent=1 // pred_check_branch
      %418 = sbr.rel (0) target = $region21
    $region20: #{tpu_custom_call.1} parent=1 // pred_region
      %s420 = ssub.s32 64, 64
      %421 = vsyncadd [#allocation5], %s420
      %s423 = sshll.u32 [#allocation4], 4
      %s424 = int_to_ptr.vmem [resolvable:$true] %s423
      %426 = dma.vmem_to_hbm [thread:$0]  %s424, 64, %s4, [#allocation5]
    $region21: #{tpu_custom_call.1} parent=1 // pred_fallthru
      _
    // Predicated region
    $region22: #{tpu_custom_call.1} parent=1 // pred_check
      _
    $region23: #{tpu_custom_call.1} parent=1 // pred_check_branch
      %428 = sbr.rel (0) target = $region25
    $region24: #{tpu_custom_call.1} parent=1 // pred_region
      %429 = dma.done [#allocation5], 64
    $region25: #{tpu_custom_call.1} parent=1 // pred_fallthru
      _
    %430 = vsyncpa [#allocation5], 1

</llo_original>
